<compile_context>
chip_gen: v5e
topology: v5e:2x2
jax: 0.10.0
libtpu: 0.0.40
codegen_flags: <defaults>
</compile_context>

<pallas_src>
import jax
import jax.numpy as jnp
from jax.experimental import pallas as pl
from jax.experimental.pallas import tpu as pltpu

# SELU constants (match torch.nn.SELU)
_SELU_ALPHA = 1.6732632423543772848170429916717
_SELU_SCALE = 1.0507009873554804934193349852946


def _conv_selu_kernel(w_ref, p_ref, o_ref):
    """out_T = SELU(W_aug @ patches_T); output is (Cout, M), lane-dense in M.

    Euclidean manifold: log/exp maps are identity -> not present.
    Dropout p=0: identity -> not present.
    """
    acc = jnp.dot(w_ref[...], p_ref[...], preferred_element_type=jnp.float32)
    # SELU: scale * (x if x > 0 else alpha * (exp(x) - 1)); clamp exp arg so the
    # positive branch never overflows.
    neg = _SELU_ALPHA * (jnp.exp(jnp.minimum(acc, 0.0)) - 1.0)
    out = _SELU_SCALE * jnp.where(acc > 0.0, acc, neg)
    o_ref[...] = out.astype(o_ref.dtype)


@jax.jit
def manifold_conv_forward(x_nchw, weight_oihw, bias):
    """ManifoldConv.forward with Euclidean manifold, 3x3 Conv2d (pad=1), SELU.

    x_nchw:      (N, Cin, H, W)   float32   (PyTorch NCHW convention)
    weight_oihw: (Cout, Cin, KH, KW)        (PyTorch Conv2d weight layout)
    bias:        (Cout,)
    returns:     (N, Cout, H, W)  float32
    """
    N, Cin, H, W = x_nchw.shape
    Cout, _, KH, KW = weight_oihw.shape
    ph, pw = KH // 2, KW // 2
    K = KH * KW * Cin
    M = N * H * W
    # +1 row for the folded bias, padded up to a sublane multiple (36+1 -> 40).
    Kp = ((K + 1 + 7) // 8) * 8

    # ---- glue: im2col built directly in (K, M) orientation (plain JAX) ----
    xp = jnp.pad(x_nchw, ((0, 0), (0, 0), (ph, ph), (pw, pw)))  # (N,Cin,H+2,W+2)
    rows = []
    for kh in range(KH):
        for kw in range(KW):
            sl = xp[:, :, kh:kh + H, kw:kw + W]                  # (N,Cin,H,W)
            rows.append(jnp.transpose(sl, (1, 0, 2, 3)).reshape(Cin, M))
    patches_t = jnp.concatenate(rows, axis=0)                    # (K, M), (kh,kw,cin)
    patches_t = jnp.concatenate(
        [patches_t,
         jnp.ones((1, M), patches_t.dtype),                      # ones row for bias
         jnp.zeros((Kp - K - 1, M), patches_t.dtype)],           # zero pad
        axis=0)                                                  # (Kp, M)

    # weight: (Cout,Cin,KH,KW) -> (Cout, KH, KW, Cin) -> (Cout, K); append bias
    # column and zero-pad to Kp so column ordering matches the patches rows.
    w_t = jnp.transpose(weight_oihw, (0, 2, 3, 1)).reshape(Cout, K)
    w_aug = jnp.concatenate(
        [w_t, bias.reshape(Cout, 1),
         jnp.zeros((Cout, Kp - K - 1), w_t.dtype)], axis=1)      # (Cout, Kp)

    # ---- hot path: single-step Pallas kernel (matmul + bias + SELU) ----
    out_t = pl.pallas_call(
        _conv_selu_kernel,
        out_shape=jax.ShapeDtypeStruct((Cout, M), jnp.float32),
        in_specs=[pl.BlockSpec(memory_space=pltpu.MemorySpace.VMEM),
                  pl.BlockSpec(memory_space=pltpu.MemorySpace.VMEM)],
        out_specs=pl.BlockSpec(memory_space=pltpu.MemorySpace.VMEM),
    )(w_aug, patches_t)                                          # (Cout, M)

    # back to NCHW: (Cout, M) -> (Cout, N, H, W) -> (N, Cout, H, W)
    return jnp.transpose(out_t.reshape(Cout, N, H, W), (1, 0, 2, 3))


def _reference(x_nchw, weight_oihw, bias):
    """Pure-JAX reference: SELU(Conv2d_3x3_pad1(x))."""
    y = jax.lax.conv_general_dilated(
        x_nchw, weight_oihw,
        window_strides=(1, 1), padding="SAME",
        dimension_numbers=("NCHW", "OIHW", "NCHW"),
        precision=jax.lax.Precision.HIGHEST,
    )
    y = y + bias.reshape(1, -1, 1, 1)
    return jax.nn.selu(y)


if __name__ == "__main__":
    # Small, deterministic example consistent with an NCHW Conv2d input.
    N, Cin, H, W = 2, 4, 16, 16
    Cout, KH, KW = 8, 3, 3

    key = jax.random.PRNGKey(0)
    kx, kw, kb = jax.random.split(key, 3)
    x = jax.random.normal(kx, (N, Cin, H, W), dtype=jnp.float32)
    weight = jax.random.normal(kw, (Cout, Cin, KH, KW), dtype=jnp.float32) * 0.1
    bias = jax.random.normal(kb, (Cout,), dtype=jnp.float32) * 0.1

    out = manifold_conv_forward(x, weight, bias)
    out = jax.block_until_ready(out)

    ref = jax.block_until_ready(_reference(x, weight, bias))
    assert out.shape == (N, Cout, H, W)
    assert jnp.allclose(out, ref, atol=1e-4, rtol=1e-4), "mismatch vs reference"

    # TODO(synk): Lorentz / Poincare log & exp maps and `out[:, 0] = 0` are not
    # needed for the default EuclideanManifold configuration and are omitted.
    print("KERNEL_OK")
</pallas_src>

<mosaic_0001>
module attributes {stable_mosaic.version = 11 : i64} {
  func.func @_conv_selu_kernel(%arg0: memref<8x40xf32, #tpu.memory_space<vmem>>, %arg1: memref<40x512xf32, #tpu.memory_space<vmem>>, %arg2: memref<8x512xf32, #tpu.memory_space<vmem>>) attributes {dimension_semantics = [], scalar_prefetch = 0 : i64, scratch_operands = 0 : i64, tpu.core_type = #tpu.core_type<tc>} {
    %c0 = arith.constant 0 : index
    %c0_0 = arith.constant 0 : index
    %0 = vector.load %arg0[%c0, %c0_0] : memref<8x40xf32, #tpu.memory_space<vmem>>, vector<8x40xf32>
    %c0_1 = arith.constant 0 : index
    %c0_2 = arith.constant 0 : index
    %1 = vector.load %arg1[%c0_1, %c0_2] : memref<40x512xf32, #tpu.memory_space<vmem>>, vector<40x512xf32>
    %cst = arith.constant dense<0.000000e+00> : vector<8x512xf32>
    %2 = tpu.matmul %0, %1, %cst {dimension_numbers = #tpu.dot_dimension_numbers<[1], [0], [0], [1], [0, 0, 1, 1], [], []>} : vector<8x40xf32>, vector<40x512xf32>, vector<8x512xf32> -> vector<8x512xf32>
    %cst_3 = arith.constant 0.000000e+00 : f32
    %3 = vector.broadcast %cst_3 : f32 to vector<8x512xf32>
    %4 = arith.minimumf %2, %3 : vector<8x512xf32>
    %5 = math.exp %4 : vector<8x512xf32>
    %cst_4 = arith.constant 1.000000e+00 : f32
    %6 = vector.broadcast %cst_4 : f32 to vector<8x512xf32>
    %7 = arith.subf %5, %6 : vector<8x512xf32>
    %cst_5 = arith.constant 1.67326319 : f32
    %8 = vector.broadcast %cst_5 : f32 to vector<8x512xf32>
    %9 = arith.mulf %8, %7 : vector<8x512xf32>
    %cst_6 = arith.constant 0.000000e+00 : f32
    %10 = vector.broadcast %cst_6 : f32 to vector<8x512xf32>
    %11 = arith.cmpf ogt, %2, %10 : vector<8x512xf32>
    %12 = arith.select %11, %2, %9 : vector<8x512xi1>, vector<8x512xf32>
    %cst_7 = arith.constant 1.05070102 : f32
    %13 = vector.broadcast %cst_7 : f32 to vector<8x512xf32>
    %14 = arith.mulf %13, %12 : vector<8x512xf32>
    %c0_8 = arith.constant 0 : index
    %c0_9 = arith.constant 0 : index
    %15 = vector.load %arg2[%c0_8, %c0_9] : memref<8x512xf32, #tpu.memory_space<vmem>>, vector<8x512xf32>
    tpu.vector_store %arg2[%c0_8, %c0_9], %14 {strides = array<i32>} : memref<8x512xf32, #tpu.memory_space<vmem>>, vector<8x512xf32>,
    return
  }
}

</mosaic_0001>

<llo_original>
// kernel: manifold_conv_forward.1
$region0: #{manifold_conv_forward.1}
  #allocation0 [shape = 'u32[]', space=smem, size = 0x4, offset = 0x4, fixed_abs, tag = 'smem constant byte address 0x4 - core index']
  #allocation1 [shape = 'u32[72,128]{1,0:T(1,128)}', space=vmem, size = 0x9000, scoped, tag = 'internal scratch']
  %s0 = inlined_call_operand.vmem [shape: f32[8,40], index: 0, kind: input, shape index: {}]
  %s1 = inlined_call_operand.vmem [shape: f32[40,512], index: 1, kind: input, shape index: {}]
  %s2 = inlined_call_operand.vmem [shape: f32[8,512], index: 2, kind: output, shape index: {}]
  %s3 = sld [smem:[#allocation0]]
  $region18: #{manifold_conv_forward.1} parent=0
    _
  %s5 = ssub.s32 1, %s3
  %s6 = scalar_select 0, %s5, %s3
  // Predicated region
  $region2: #{manifold_conv_forward.1} parent=0 // pred_check
    _
  $region3: #{manifold_conv_forward.1} parent=0 // pred_check_branch
    %8 = sbr.rel (0) target = $region5
  $region4: #{manifold_conv_forward.1} parent=0 // pred_region
    _
  $region5: #{manifold_conv_forward.1} parent=0 // pred_fallthru
    _
  // Predicated region
  $region6: #{manifold_conv_forward.1} parent=0 // pred_check
    _
  $region7: #{manifold_conv_forward.1} parent=0 // pred_check_branch
    %10 = sbr.rel (0) target = $region9
  $region8: #{manifold_conv_forward.1} parent=0 // pred_region
    _
  $region9: #{manifold_conv_forward.1} parent=0 // pred_fallthru
    _
  %v11 = vld [vmem:[%s0] sm:$0xff]
  %v12 = vld [vmem:[%s1] sm:$0xff]
  %v13 = vld [vmem:[%s1 + $0x8] sm:$0xff]
  %v14 = vld [vmem:[%s1 + $0x10] sm:$0xff]
  %v15 = vld [vmem:[%s1 + $0x18] sm:$0xff]
  %v16 = vld [vmem:[%s1 + $0x20] sm:$0xff]
  %v17 = vld [vmem:[%s1 + $0x28] sm:$0xff]
  %v18 = vld [vmem:[%s1 + $0x30] sm:$0xff]
  %v19 = vld [vmem:[%s1 + $0x38] sm:$0xff]
  %v20 = vld [vmem:[%s1 + $0x40] sm:$0xff]
  %v21 = vld [vmem:[%s1 + $0x48] sm:$0xff]
  %v22 = vld [vmem:[%s1 + $0x50] sm:$0xff]
  %v23 = vld [vmem:[%s1 + $0x58] sm:$0xff]
  %v24 = vld [vmem:[%s1 + $0x60] sm:$0xff]
  %v25 = vld [vmem:[%s1 + $0x68] sm:$0xff]
  %v26 = vld [vmem:[%s1 + $0x70] sm:$0xff]
  %v27 = vld [vmem:[%s1 + $0x78] sm:$0xff]
  %v28 = vld [vmem:[%s1 + $0x80] sm:$0xff]
  %v29 = vld [vmem:[%s1 + $0x88] sm:$0xff]
  %v30 = vld [vmem:[%s1 + $0x90] sm:$0xff]
  %v31 = vld [vmem:[%s1 + $0x98] sm:$0xff]
  %vm32 = vcmask 326656
  %v34 = vsel %vm32, %v11, 0
  %36 = vmatpush.msra.mxu0 0.0
  %37 = vmatpush.msra.mxu0 0.0
  %38 = vmatpush.msra.mxu0 0.0
  %39 = vmatpush.msra.mxu0 0.0
  %40 = vmatpush.msra.mxu0 0.0
  %41 = vmatpush.msra.mxu0 0.0
  %42 = vmatpush.msra.mxu0 0.0
  %43 = vmatpush.msra.mxu0 0.0
  %44 = vmatpush.msra.mxu0 0.0
  %45 = vmatpush.msra.mxu0 0.0
  %46 = vmatpush.msra.mxu0 0.0
  %47 = vmatpush.msra.mxu0 %v28
  %48 = vmatpush.msra.mxu0 %v24
  %49 = vmatpush.msra.mxu0 %v20
  %50 = vmatpush.msra.mxu0 %v16
  %51 = vmatpush.msra.mxu0 %v12
  %52 = vmatmul.f32.gmra.mxu0 %v34
  %v53 = vpop.f32.mrf.mxu0
  %v54 = vadd.f32 0.0, %v53
  %55 = vdwg.mxu0
  %56 = vmatpush.msra.mxu0 0.0
  %57 = vmatpush.msra.mxu0 0.0
  %58 = vmatpush.msra.mxu0 0.0
  %59 = vmatpush.msra.mxu0 0.0
  %60 = vmatpush.msra.mxu0 0.0
  %61 = vmatpush.msra.mxu0 0.0
  %62 = vmatpush.msra.mxu0 0.0
  %63 = vmatpush.msra.mxu0 0.0
  %64 = vmatpush.msra.mxu0 0.0
  %65 = vmatpush.msra.mxu0 0.0
  %66 = vmatpush.msra.mxu0 0.0
  %67 = vmatpush.msra.mxu0 %v29
  %68 = vmatpush.msra.mxu0 %v25
  %69 = vmatpush.msra.mxu0 %v21
  %70 = vmatpush.msra.mxu0 %v17
  %71 = vmatpush.msra.mxu0 %v13
  %72 = vmatmul.f32.gmra.mxu0 %v34
  %v73 = vpop.f32.mrf.mxu0
  %v74 = vadd.f32 0.0, %v73
  %75 = vdwg.mxu0
  %76 = vmatpush.msra.mxu0 0.0
  %77 = vmatpush.msra.mxu0 0.0
  %78 = vmatpush.msra.mxu0 0.0
  %79 = vmatpush.msra.mxu0 0.0
  %80 = vmatpush.msra.mxu0 0.0
  %81 = vmatpush.msra.mxu0 0.0
  %82 = vmatpush.msra.mxu0 0.0
  %83 = vmatpush.msra.mxu0 0.0
  %84 = vmatpush.msra.mxu0 0.0
  %85 = vmatpush.msra.mxu0 0.0
  %86 = vmatpush.msra.mxu0 0.0
  %87 = vmatpush.msra.mxu0 %v30
  %88 = vmatpush.msra.mxu0 %v26
  %89 = vmatpush.msra.mxu0 %v22
  %90 = vmatpush.msra.mxu0 %v18
  %91 = vmatpush.msra.mxu0 %v14
  %92 = vmatmul.f32.gmra.mxu0 %v34
  %v93 = vpop.f32.mrf.mxu0
  %v94 = vadd.f32 0.0, %v93
  %95 = vdwg.mxu0
  %96 = vmatpush.msra.mxu0 0.0
  %97 = vmatpush.msra.mxu0 0.0
  %98 = vmatpush.msra.mxu0 0.0
  %99 = vmatpush.msra.mxu0 0.0
  %100 = vmatpush.msra.mxu0 0.0
  %101 = vmatpush.msra.mxu0 0.0
  %102 = vmatpush.msra.mxu0 0.0
  %103 = vmatpush.msra.mxu0 0.0
  %104 = vmatpush.msra.mxu0 0.0
  %105 = vmatpush.msra.mxu0 0.0
  %106 = vmatpush.msra.mxu0 0.0
  %107 = vmatpush.msra.mxu0 %v31
  %108 = vmatpush.msra.mxu0 %v27
  %109 = vmatpush.msra.mxu0 %v23
  %110 = vmatpush.msra.mxu0 %v19
  %111 = vmatpush.msra.mxu0 %v15
  %112 = vmatmul.f32.gmra.mxu0 %v34
  %v113 = vpop.f32.mrf.mxu0
  %v114 = vadd.f32 0.0, %v113
  %115 = vdwg.mxu0
  %v116 = vmin.f32 %v54, 0.0
  %v117 = vmin.f32 %v74, 0.0
  %v118 = vmin.f32 %v94, 0.0
  %v119 = vmin.f32 %v114, 0.0
  %v120 = vmul.f32 %v116, 1.442695
  %v121 = vpow.pop %v120
  %v122 = vmul.f32 %v117, 1.442695
  %v123 = vpow.pop %v122
  %v124 = vmul.f32 %v118, 1.442695
  %v125 = vpow.pop %v124
  %v126 = vmul.f32 %v119, 1.442695
  %v127 = vpow.pop %v126
  %v128 = vsub.f32 %v121, 1.0
  %v129 = vsub.f32 %v123, 1.0
  %v130 = vsub.f32 %v125, 1.0
  %v131 = vsub.f32 %v127, 1.0
  %v132 = vmul.f32 %v128, 1.6732632
  %v133 = vmul.f32 %v129, 1.6732632
  %v134 = vmul.f32 %v130, 1.6732632
  %v135 = vmul.f32 %v131, 1.6732632
  %vm136 = vcmp.gt.f32.partialorder %v54, 0.0
  %vm137 = vcmp.gt.f32.partialorder %v74, 0.0
  %vm138 = vcmp.gt.f32.partialorder %v94, 0.0
  %vm139 = vcmp.gt.f32.partialorder %v114, 0.0
  %v140 = vsel %vm136, %v54, %v132
  %v141 = vsel %vm137, %v74, %v133
  %v142 = vsel %vm138, %v94, %v134
  %v143 = vsel %vm139, %v114, %v135
  %v144 = vmul.f32 %v140, 1.050701
  %v145 = vmul.f32 %v141, 1.050701
  %v146 = vmul.f32 %v142, 1.050701
  %v147 = vmul.f32 %v143, 1.050701
  %148 = vst [vmem:[%s2] sm:$0xff] %v144
  %149 = vst [vmem:[%s2 + $0x8] sm:$0xff] %v145
  %150 = vst [vmem:[%s2 + $0x10] sm:$0xff] %v146
  %151 = vst [vmem:[%s2 + $0x18] sm:$0xff] %v147
  // Predicated region
  $region10: #{manifold_conv_forward.1} parent=0 // pred_check
    _
  $region11: #{manifold_conv_forward.1} parent=0 // pred_check_branch
    %153 = sbr.rel (0) target = $region13
  $region12: #{manifold_conv_forward.1} parent=0 // pred_region
    _
  $region13: #{manifold_conv_forward.1} parent=0 // pred_fallthru
    _
  // Predicated region
  $region14: #{manifold_conv_forward.1} parent=0 // pred_check
    _
  $region15: #{manifold_conv_forward.1} parent=0 // pred_check_branch
    %155 = sbr.rel (0) target = $region17
  $region16: #{manifold_conv_forward.1} parent=0 // pred_region
    _
  $region17: #{manifold_conv_forward.1} parent=0 // pred_fallthru
    _

</llo_original>
